<compile_context>
chip_gen: v7x
topology: tpu7x:2x2x1
jax: 0.10.0
libtpu: 0.0.40
codegen_flags: <defaults>
</compile_context>

<pallas_src>
import jax
import jax.numpy as jnp
from jax.experimental import pallas as pl
from jax.experimental.pallas import tpu as pltpu


# ----------------------------------------------------------------------------
# DWT (Haar wavelet downsample) Pallas kernel
# ----------------------------------------------------------------------------

def _dwt_kernel(p_ref, o_ref):
    # p_ref: (2, 2, 1, Tr, LW)  -> [h-parity, w-parity, batch-slice, row, lane]
    # o_ref: (1, 4, Tr, LW)     -> [batch-slice, subband(LL,HL,LH,HH), row, lane]
    x1 = p_ref[0, 0, 0]   # x[:, :, 0::2, 0::2]
    x2 = p_ref[1, 0, 0]   # x[:, :, 1::2, 0::2]
    x3 = p_ref[0, 1, 0]   # x[:, :, 0::2, 1::2]
    x4 = p_ref[1, 1, 0]   # x[:, :, 1::2, 1::2]
    # Haar butterfly: 8 adds + 4 muls (vs ~16 ops with explicit negations).
    t0 = x1 + x2
    t1 = x3 + x4
    u0 = x2 - x1
    u1 = x4 - x3
    o_ref[0, 0] = 0.5 * (t0 + t1)   # LL =  (x1 + x2 + x3 + x4)/2
    o_ref[0, 1] = 0.5 * (t1 - t0)   # HL = (-x1 - x2 + x3 + x4)/2
    o_ref[0, 2] = 0.5 * (u0 + u1)   # LH = (-x1 + x2 - x3 + x4)/2
    o_ref[0, 3] = 0.5 * (u1 - u0)   # HH =  (x1 - x2 - x3 + x4)/2


def _pick_lane_width(flat_len, max_lanes=2048):
    """Largest multiple of 128 that divides flat_len (capped); else flat_len."""
    best = None
    lw = 128
    while lw <= min(flat_len, max_lanes):
        if flat_len % lw == 0:
            best = lw
        lw += 128
    return best if best is not None else flat_len


def _pick_row_tile(nrows, row_bytes, budget_bytes):
    """Row-block size that divides nrows and is a multiple of 8 or == nrows."""
    cands = [d for d in range(8, nrows + 1, 8) if nrows % d == 0]
    cands.append(nrows)
    fitting = [d for d in cands if d * row_bytes <= budget_bytes]
    return max(fitting) if fitting else min(cands)


def dwt(x):
    """Pallas DWT: NCHW (even H, W) float32 input -> (N, 4C, H/2, W/2)."""
    N, C, H, W = x.shape
    assert H % 2 == 0 and W % 2 == 0, "DWT needs even spatial dims (WALayer pads)"
    Hh, Wh = H // 2, W // 2
    L = C * Hh * Wh                      # flat per-phase / per-batch-item length
    itemsize = x.dtype.itemsize

    # Lane-dense slab: flatten (C, Hh, Wh) -> (R, LW) with LW a multiple of 128.
    LW = _pick_lane_width(L)
    R = L // LW
    # ~2 MiB per phase per block => ~32 MiB live with double buffering.
    Tr = _pick_row_tile(R, LW * itemsize, budget_bytes=2 * 1024 * 1024)

    # Layout plumbing: expose the four 2x2 spatial phases, flattened per image.
    phases = x.reshape(N, C, Hh, 2, Wh, 2).transpose(3, 5, 0, 1, 2, 4)
    phases = phases.reshape(2, 2, N, R, LW)

    out = pl.pallas_call(
        _dwt_kernel,
        out_shape=jax.ShapeDtypeStruct((N, 4, R, LW), x.dtype),
        grid_spec=pltpu.PrefetchScalarGridSpec(
            num_scalar_prefetch=0,
            grid=(N, R // Tr),
            in_specs=[pl.BlockSpec((2, 2, 1, Tr, LW),
                                   lambda n, r: (0, 0, n, r, 0))],
            out_specs=pl.BlockSpec((1, 4, Tr, LW),
                                   lambda n, r: (n, 0, r, 0)),
        ),
        compiler_params=pltpu.CompilerParams(
            dimension_semantics=("parallel", "parallel"),
            vmem_limit_bytes=48 * 1024 * 1024,
            allow_input_fusion=[True],
        ),
    )(phases)

    # (N, 4, R, LW) is already torch's cat((LL,HL,LH,HH), dim=1) memory order:
    # the final reshape is free (no transpose, no extra HBM round trip).
    return out.reshape(N, 4 * C, Hh, Wh)


# ----------------------------------------------------------------------------
# Per-channel rescale kernel:  out[n, c, h, w] = x[n, c, h, w] * y[n, c]
# ----------------------------------------------------------------------------

def _scale_kernel(x_ref, y_ref, o_ref):
    # x_ref: (Tr, HW) flattened image rows; y_ref: (Tr, 1) per-(n,c) gain.
    o_ref[...] = x_ref[...] * y_ref[...]


def scale_by_channel(x, y):
    N, C, H, W = x.shape
    NC, HW = N * C, H * W
    x2d = x.reshape(NC, HW)                      # free reshape, lane-dense minor
    y2d = y.reshape(NC, 1).astype(x.dtype)
    Tr = _pick_row_tile(NC, HW * x.dtype.itemsize, budget_bytes=2 * 1024 * 1024)

    out = pl.pallas_call(
        _scale_kernel,
        out_shape=jax.ShapeDtypeStruct((NC, HW), x.dtype),
        grid_spec=pltpu.PrefetchScalarGridSpec(
            num_scalar_prefetch=0,
            grid=(NC // Tr,),
            in_specs=[pl.BlockSpec((Tr, HW), lambda r: (r, 0)),
                      pl.BlockSpec((Tr, 1), lambda r: (r, 0))],
            out_specs=pl.BlockSpec((Tr, HW), lambda r: (r, 0)),
        ),
        compiler_params=pltpu.CompilerParams(
            dimension_semantics=("parallel",),
            vmem_limit_bytes=48 * 1024 * 1024,
        ),
    )(x2d, y2d)
    return out.reshape(N, C, H, W)


# ----------------------------------------------------------------------------
# WALayer forward
# ----------------------------------------------------------------------------

def _se_branch(v, w1, b1, w2, b2):
    # 1x1 convs on a 1x1 spatial map == tiny dense layers.
    h = jnp.maximum(v @ w1.T + b1, 0.0)
    return jax.nn.sigmoid(h @ w2.T + b2)


def wa_layer(x, params):
    """Pallas/JAX implementation of WALayer.forward."""
    N, C, H, W = x.shape
    Hd, Wd = H % 2, W % 2
    x_ = jnp.pad(x, ((0, 0), (0, 0), (0, Hd), (0, Wd))) if (Hd or Wd) else x
    w = dwt(x_)                                   # Pallas kernel
    y_avg = jnp.mean(w, axis=(2, 3))              # AdaptiveAvgPool2d(1)
    y_max = jnp.max(w, axis=(2, 3))               # AdaptiveMaxPool2d(1)
    # TODO(synk): the SE MLPs (1x1 convs on 1x1 pooled maps, <1 KFLOP) are left
    # to XLA -- they sit far below one (8,128) tile and a Pallas kernel would
    # be pure padding.
    y = _se_branch(y_avg, *params["du1"]) + _se_branch(y_max, *params["du2"])
    return scale_by_channel(x, y)                 # Pallas kernel


# ----------------------------------------------------------------------------
# Pure-JAX references (ground truth)
# ----------------------------------------------------------------------------

def dwt_reference(x):
    x01 = x[:, :, 0::2, :] / 2
    x02 = x[:, :, 1::2, :] / 2
    x1 = x01[:, :, :, 0::2]
    x2 = x02[:, :, :, 0::2]
    x3 = x01[:, :, :, 1::2]
    x4 = x02[:, :, :, 1::2]
    x_LL = x1 + x2 + x3 + x4
    x_HL = -x1 - x2 + x3 + x4
    x_LH = -x1 + x2 - x3 + x4
    x_HH = x1 - x2 - x3 + x4
    return jnp.concatenate((x_LL, x_HL, x_LH, x_HH), axis=1)


def wa_layer_reference(x, params):
    N, C, H, W = x.shape
    Hd, Wd = H % 2, W % 2
    x_ = jnp.pad(x, ((0, 0), (0, 0), (0, Hd), (0, Wd))) if (Hd or Wd) else x
    w = dwt_reference(x_)
    y_avg = jnp.mean(w, axis=(2, 3))
    y_max = jnp.max(w, axis=(2, 3))
    y = _se_branch(y_avg, *params["du1"]) + _se_branch(y_max, *params["du2"])
    return x * y[:, :, None, None]


if __name__ == "__main__":
    key = jax.random.PRNGKey(0)
    k_x, k1, k2, k3, k4, k5, k6, k7, k8 = jax.random.split(key, 9)

    N, C, H, W = 2, 4, 16, 16
    reduction = 16
    m = max(1, (C * 4) // reduction)

    x = jax.random.normal(k_x, (N, C, H, W), dtype=jnp.float32)
    params = {
        "du1": (0.1 * jax.random.normal(k1, (m, 4 * C), jnp.float32),
                0.1 * jax.random.normal(k2, (m,), jnp.float32),
                0.1 * jax.random.normal(k3, (C, m), jnp.float32),
                0.1 * jax.random.normal(k4, (C,), jnp.float32)),
        "du2": (0.1 * jax.random.normal(k5, (m, 4 * C), jnp.float32),
                0.1 * jax.random.normal(k6, (m,), jnp.float32),
                0.1 * jax.random.normal(k7, (C, m), jnp.float32),
                0.1 * jax.random.normal(k8, (C,), jnp.float32)),
    }

    wa = jax.jit(lambda inp: wa_layer(inp, params))
    y = wa(x)
    jax.block_until_ready(y)

    y_ref = wa_layer_reference(x, params)
    assert y.shape == (N, C, H, W), y.shape
    assert y.dtype == x.dtype
    assert jnp.allclose(y, y_ref, atol=1e-5, rtol=1e-5), "WALayer mismatch vs reference"

    # Also validate the DWT kernel on its own.
    w_k = jax.jit(dwt)(x)
    assert w_k.shape == (N, 4 * C, H // 2, W // 2), w_k.shape
    assert jnp.allclose(w_k, dwt_reference(x), atol=1e-5, rtol=1e-5), "DWT mismatch"

    print("KERNEL_OK")
</pallas_src>

<mosaic_0001>
module attributes {stable_mosaic.version = 11 : i64} {
  func.func @_dwt_kernel(%arg0: i32, %arg1: i32, %arg2: memref<2x2x1x1x256xf32, #tpu.memory_space<vmem>>, %arg3: memref<1x4x1x256xf32, #tpu.memory_space<vmem>>) attributes {dimension_semantics = [#tpu.dimension_semantics<parallel>, #tpu.dimension_semantics<parallel>], iteration_bounds = array<i64: 2, 1>, scalar_prefetch = 0 : i64, scratch_operands = 0 : i64, tpu.core_type = #tpu.core_type<tc>, window_params = [{transform_indices = @transform_0, window_bounds = array<i64: 2, 2, 1, 1, 256>}, {transform_indices = @transform_1, window_bounds = array<i64: 1, 4, 1, 256>}]} {
    %c0 = arith.constant 0 : index
    %c0_0 = arith.constant 0 : index
    %c0_1 = arith.constant 0 : index
    %c0_2 = arith.constant 0 : index
    %c0_3 = arith.constant 0 : index
    %0 = vector.load %arg2[%c0, %c0_0, %c0_1, %c0_2, %c0_3] : memref<2x2x1x1x256xf32, #tpu.memory_space<vmem>>, vector<1x1x1x1x256xf32>
    %1 = vector.shape_cast %0 : vector<1x1x1x1x256xf32> to vector<1x256xf32>
    %c1 = arith.constant 1 : index
    %c0_4 = arith.constant 0 : index
    %c0_5 = arith.constant 0 : index
    %c0_6 = arith.constant 0 : index
    %c0_7 = arith.constant 0 : index
    %2 = vector.load %arg2[%c1, %c0_4, %c0_5, %c0_6, %c0_7] : memref<2x2x1x1x256xf32, #tpu.memory_space<vmem>>, vector<1x1x1x1x256xf32>
    %3 = vector.shape_cast %2 : vector<1x1x1x1x256xf32> to vector<1x256xf32>
    %c0_8 = arith.constant 0 : index
    %c1_9 = arith.constant 1 : index
    %c0_10 = arith.constant 0 : index
    %c0_11 = arith.constant 0 : index
    %c0_12 = arith.constant 0 : index
    %4 = vector.load %arg2[%c0_8, %c1_9, %c0_10, %c0_11, %c0_12] : memref<2x2x1x1x256xf32, #tpu.memory_space<vmem>>, vector<1x1x1x1x256xf32>
    %5 = vector.shape_cast %4 : vector<1x1x1x1x256xf32> to vector<1x256xf32>
    %c1_13 = arith.constant 1 : index
    %c1_14 = arith.constant 1 : index
    %c0_15 = arith.constant 0 : index
    %c0_16 = arith.constant 0 : index
    %c0_17 = arith.constant 0 : index
    %6 = vector.load %arg2[%c1_13, %c1_14, %c0_15, %c0_16, %c0_17] : memref<2x2x1x1x256xf32, #tpu.memory_space<vmem>>, vector<1x1x1x1x256xf32>
    %7 = vector.shape_cast %6 : vector<1x1x1x1x256xf32> to vector<1x256xf32>
    %8 = arith.addf %1, %3 : vector<1x256xf32>
    %9 = arith.addf %5, %7 : vector<1x256xf32>
    %10 = arith.subf %3, %1 : vector<1x256xf32>
    %11 = arith.subf %7, %5 : vector<1x256xf32>
    %12 = arith.addf %8, %9 : vector<1x256xf32>
    %cst = arith.constant 5.000000e-01 : f32
    %13 = vector.broadcast %cst : f32 to vector<1x256xf32>
    %14 = arith.mulf %13, %12 : vector<1x256xf32>
    %c0_18 = arith.constant 0 : index
    %c0_19 = arith.constant 0 : index
    %c0_20 = arith.constant 0 : index
    %c0_21 = arith.constant 0 : index
    %15 = vector.load %arg3[%c0_18, %c0_19, %c0_20, %c0_21] : memref<1x4x1x256xf32, #tpu.memory_space<vmem>>, vector<1x1x1x256xf32>
    %16 = vector.shape_cast %15 : vector<1x1x1x256xf32> to vector<1x256xf32>
    %17 = vector.shape_cast %14 : vector<1x256xf32> to vector<1x1x1x256xf32>
    tpu.vector_store %arg3[%c0_18, %c0_19, %c0_20, %c0_21], %17 {strides = array<i32>} : memref<1x4x1x256xf32, #tpu.memory_space<vmem>>, vector<1x1x1x256xf32>,
    %18 = arith.subf %9, %8 : vector<1x256xf32>
    %cst_22 = arith.constant 5.000000e-01 : f32
    %19 = vector.broadcast %cst_22 : f32 to vector<1x256xf32>
    %20 = arith.mulf %19, %18 : vector<1x256xf32>
    %c0_23 = arith.constant 0 : index
    %c1_24 = arith.constant 1 : index
    %c0_25 = arith.constant 0 : index
    %c0_26 = arith.constant 0 : index
    %21 = vector.load %arg3[%c0_23, %c1_24, %c0_25, %c0_26] : memref<1x4x1x256xf32, #tpu.memory_space<vmem>>, vector<1x1x1x256xf32>
    %22 = vector.shape_cast %21 : vector<1x1x1x256xf32> to vector<1x256xf32>
    %23 = vector.shape_cast %20 : vector<1x256xf32> to vector<1x1x1x256xf32>
    tpu.vector_store %arg3[%c0_23, %c1_24, %c0_25, %c0_26], %23 {strides = array<i32>} : memref<1x4x1x256xf32, #tpu.memory_space<vmem>>, vector<1x1x1x256xf32>,
    %24 = arith.addf %10, %11 : vector<1x256xf32>
    %cst_27 = arith.constant 5.000000e-01 : f32
    %25 = vector.broadcast %cst_27 : f32 to vector<1x256xf32>
    %26 = arith.mulf %25, %24 : vector<1x256xf32>
    %c0_28 = arith.constant 0 : index
    %c2 = arith.constant 2 : index
    %c0_29 = arith.constant 0 : index
    %c0_30 = arith.constant 0 : index
    %27 = vector.load %arg3[%c0_28, %c2, %c0_29, %c0_30] : memref<1x4x1x256xf32, #tpu.memory_space<vmem>>, vector<1x1x1x256xf32>
    %28 = vector.shape_cast %27 : vector<1x1x1x256xf32> to vector<1x256xf32>
    %29 = vector.shape_cast %26 : vector<1x256xf32> to vector<1x1x1x256xf32>
    tpu.vector_store %arg3[%c0_28, %c2, %c0_29, %c0_30], %29 {strides = array<i32>} : memref<1x4x1x256xf32, #tpu.memory_space<vmem>>, vector<1x1x1x256xf32>,
    %30 = arith.subf %11, %10 : vector<1x256xf32>
    %cst_31 = arith.constant 5.000000e-01 : f32
    %31 = vector.broadcast %cst_31 : f32 to vector<1x256xf32>
    %32 = arith.mulf %31, %30 : vector<1x256xf32>
    %c0_32 = arith.constant 0 : index
    %c3 = arith.constant 3 : index
    %c0_33 = arith.constant 0 : index
    %c0_34 = arith.constant 0 : index
    %33 = vector.load %arg3[%c0_32, %c3, %c0_33, %c0_34] : memref<1x4x1x256xf32, #tpu.memory_space<vmem>>, vector<1x1x1x256xf32>
    %34 = vector.shape_cast %33 : vector<1x1x1x256xf32> to vector<1x256xf32>
    %35 = vector.shape_cast %32 : vector<1x256xf32> to vector<1x1x1x256xf32>
    tpu.vector_store %arg3[%c0_32, %c3, %c0_33, %c0_34], %35 {strides = array<i32>} : memref<1x4x1x256xf32, #tpu.memory_space<vmem>>, vector<1x1x1x256xf32>,
    return
  }
  func.func @transform_0(%arg0: i32, %arg1: i32) -> (i32, i32, i32, i32, i32) {
    %c0_i32 = arith.constant 0 : i32
    %c0_i32_0 = arith.constant 0 : i32
    %c0_i32_1 = arith.constant 0 : i32
    %c0_i32_2 = arith.constant 0 : i32
    return %c0_i32, %c0_i32_0, %arg0, %arg1, %c0_i32_1 : i32, i32, i32, i32, i32
  }
  func.func @transform_1(%arg0: i32, %arg1: i32) -> (i32, i32, i32, i32) {
    %c0_i32 = arith.constant 0 : i32
    %c0_i32_0 = arith.constant 0 : i32
    %c0_i32_1 = arith.constant 0 : i32
    return %arg0, %c0_i32, %arg1, %c0_i32_0 : i32, i32, i32, i32
  }
}

module attributes {stable_mosaic.version = 11 : i64} {
  func.func @_scale_kernel(%arg0: i32, %arg1: memref<8x256xf32, #tpu.memory_space<vmem>>, %arg2: memref<8x1xf32, #tpu.memory_space<vmem>>, %arg3: memref<8x256xf32, #tpu.memory_space<vmem>>) attributes {dimension_semantics = [#tpu.dimension_semantics<parallel>], iteration_bounds = array<i64: 1>, scalar_prefetch = 0 : i64, scratch_operands = 0 : i64, tpu.core_type = #tpu.core_type<tc>, window_params = [{transform_indices = @transform_0, window_bounds = array<i64: 8, 256>}, {transform_indices = @transform_1, window_bounds = array<i64: 8, 1>}, {transform_indices = @transform_2, window_bounds = array<i64: 8, 256>}]} {
    %c0 = arith.constant 0 : index
    %c0_0 = arith.constant 0 : index
    %0 = vector.load %arg1[%c0, %c0_0] : memref<8x256xf32, #tpu.memory_space<vmem>>, vector<8x256xf32>
    %c0_1 = arith.constant 0 : index
    %c0_2 = arith.constant 0 : index
    %1 = vector.load %arg2[%c0_1, %c0_2] : memref<8x1xf32, #tpu.memory_space<vmem>>, vector<8x1xf32>
    %2 = vector.broadcast %1 : vector<8x1xf32> to vector<8x256xf32>
    %3 = arith.mulf %0, %2 : vector<8x256xf32>
    %c0_3 = arith.constant 0 : index
    %c0_4 = arith.constant 0 : index
    %4 = vector.load %arg3[%c0_3, %c0_4] : memref<8x256xf32, #tpu.memory_space<vmem>>, vector<8x256xf32>
    tpu.vector_store %arg3[%c0_3, %c0_4], %3 {strides = array<i32>} : memref<8x256xf32, #tpu.memory_space<vmem>>, vector<8x256xf32>,
    return
  }
  func.func @transform_0(%arg0: i32) -> (i32, i32) {
    %c0_i32 = arith.constant 0 : i32
    %c0_i32_0 = arith.constant 0 : i32
    return %arg0, %c0_i32 : i32, i32
  }
  func.func @transform_1(%arg0: i32) -> (i32, i32) {
    %c0_i32 = arith.constant 0 : i32
    %c0_i32_0 = arith.constant 0 : i32
    return %arg0, %c0_i32 : i32, i32
  }
  func.func @transform_2(%arg0: i32) -> (i32, i32) {
    %c0_i32 = arith.constant 0 : i32
    %c0_i32_0 = arith.constant 0 : i32
    return %arg0, %c0_i32 : i32, i32
  }
}

</mosaic_0001>

<llo_original>
// kernel: _lambda_.2
$region0: #{_lambda_.2}
  #allocation0 [shape = 'u32[]', space=smem, size = 0x4, offset = 0x4, fixed_abs, tag = 'smem constant byte address 0x4 - core index']
  #allocation1 [shape = 'u32[144,128]{1,0:T(1,128)}', space=vmem, size = 0x12000, scoped, tag = 'internal scratch']
  %s0 = inlined_call_operand.vmem [shape: f32[2,2,2,1,256], index: 0, kind: input, shape index: {}]
  %s1 = inlined_call_operand.vmem [shape: f32[2,4,1,256], index: 1, kind: output, shape index: {}]
  %s2 = sld [smem:[#allocation0]]
  $region78: #{_lambda_.2} parent=0
    _
  %s4 = ssub.s32 1, %s2
  %s5 = scalar_select 0, %s4, %s2
  $region1: #{_lambda_.2} parent=0
    #allocation2 [shape = 'u8[8192]{0}', space=vmem, size = 0x2000, scoped, tag = 'input window, operand 0']
    loop: start=0, step=1, limit=4
    $region2: #{_lambda_.2} parent=1 // loop_pre_header
      _
    $region3: #{_lambda_.2} parent=1 // loop_header
      %s7 = sphi 0, %s11
      %p8 = scmp.ge.s32.totalorder %s7, 4
      %s14 = sphi 0, %s26
      %s15 = sphi 0, %s22
      %s16 = sphi 0, %s14
      %s17 = sphi 0, %s15
      %s18 = sphi 0, %s16
      %s19 = sphi 0, %s17
      %s31 = sphi 0, %s33
      %s34 = sphi 0, %s31
      %s35 = sphi 0, %s34
      %s51 = sphi 0, %s35
      %s59 = sphi 0, %s61
      %s62 = sphi 0, %s59
      %s63 = sphi 0, %s62
      %s79 = sphi 0, %s63
    $region4: #{_lambda_.2} parent=1 // loop_header_branch
      %10 = sbr.rel (%p8) target = $region8
    $region5: #{_lambda_.2} parent=1 // loop_body
      %s12 = ssub.s32 %s7, 1
      %s13 = ssub.s32 %s7, 2
      %s20 = sadd.s32 1, %s15
      %p21 = scmp.ge.s32.totalorder %s20, 1
      %s22 = scalar_select %p21, 0, %s20
      %s23 = sadd.s32 1, %s14
      %s24 = scalar_select %p21, %s23, %s14
      %p25 = scmp.ge.s32.totalorder %s24, 2
      %s26 = scalar_select %p25, 0, %s24
      %s27 = ssub.s32 %s14, %s26
      %s28 = ssub.s32 %s15, %s22
      %s29 = sor.u32 %s27, %s28
      %p30 = scmp.eq.s32.totalorder %s29, 0
      %s32 = sadd.s32 %s31, 1
      %s33 = scalar_select %p30, %s31, %s32
      %p36 = pneg %p30
      %p37 = scmp.eq.s32.totalorder %s7, 1
      %p38 = por %p36, %p37
      %p39 = scmp.ne.s32.totalorder %s31, %s34
      %p40 = scmp.eq.s32.totalorder %s7, 0
      %p41 = por %p39, %p40
      %p42 = scmp.ne.s32.totalorder %s31, %s34
      %p43 = scmp.eq.s32.totalorder %s12, 1
      %p44 = por %p42, %p43
      %p45 = scmp.ne.s32.totalorder %s34, %s35
      %p46 = scmp.eq.s32.totalorder %s12, 0
      %p47 = por %p45, %p46
      %p48 = scmp.ne.s32.totalorder %s34, %s35
      %p49 = scmp.eq.s32.totalorder %s13, 1
      %p50 = por %p48, %p49
      %p52 = scmp.ne.s32.totalorder %s35, %s51
      %p53 = scmp.eq.s32.totalorder %s13, 0
      %p54 = por %p52, %p53
      %s55 = ssub.s32 %s14, %s26
      %s56 = ssub.s32 %s15, %s22
      %s57 = sor.u32 %s55, %s56
      %p58 = scmp.eq.s32.totalorder %s57, 0
      %s60 = sadd.s32 %s59, 1
      %s61 = scalar_select %p58, %s59, %s60
      %p64 = pneg %p58
      %p65 = scmp.eq.s32.totalorder %s7, 1
      %p66 = por %p64, %p65
      %p67 = scmp.ne.s32.totalorder %s59, %s62
      %p68 = scmp.eq.s32.totalorder %s7, 0
      %p69 = por %p67, %p68
      %p70 = scmp.ne.s32.totalorder %s59, %s62
      %p71 = scmp.eq.s32.totalorder %s12, 1
      %p72 = por %p70, %p71
      %p73 = scmp.ne.s32.totalorder %s62, %s63
      %p74 = scmp.eq.s32.totalorder %s12, 0
      %p75 = por %p73, %p74
      %p76 = scmp.ne.s32.totalorder %s62, %s63
      %p77 = scmp.eq.s32.totalorder %s13, 1
      %p78 = por %p76, %p77
      %p80 = scmp.ne.s32.totalorder %s63, %s79
      %p81 = scmp.eq.s32.totalorder %s13, 0
      %p82 = por %p80, %p81
      %p83 = scmp.le.s32.totalorder 1, %s7
      %p84 = scmp.lt.s32.totalorder %s7, 3
      %p85 = pnand %p83, %p84
      %p86 = pneg %p85
      // Predicated region
      $region9: #{_lambda_.2} parent=5 // pred_check
        _
      $region10: #{_lambda_.2} parent=5 // pred_check_branch
        %88 = sbr.rel (%p85) target = $region12
      $region11: #{_lambda_.2} parent=5 // pred_region
        %s89 = ssub.s32 %s7, 1
      $region12: #{_lambda_.2} parent=5 // pred_fallthru
        _
      %p90 = scmp.lt.s32.totalorder %s7, 2
      // Predicated region
      $region13: #{_lambda_.2} parent=5 // pred_check
        %p91 = pneg %p90
      $region14: #{_lambda_.2} parent=5 // pred_check_branch
        %93 = sbr.rel (%p91) target = $region16
      $region15: #{_lambda_.2} parent=5 // pred_region
        // Predicated region
        $region17: #{_lambda_.2} parent=15 // pred_check
          %p94 = pneg %p41
        $region18: #{_lambda_.2} parent=15 // pred_check_branch
          %96 = sbr.rel (%p94) target = $region20
        $region19: #{_lambda_.2} parent=15 // pred_region
          %s97 = sand.u32 %s31, 1
          %s98 = sand.u32 %s31, 1
          %s99 = smul.addr %s98, 8
          %s100 = scalar_lea.vmem [#allocation2], %s99
          %s101 = smul.addr %s15, 2
          %s102 = smul.addr %s14, 2
          %s103 = sadd.s32 %s101, %s102
          %s104 = scalar_lea.vmem %s0, %s103
          // Predicated region
          $region21: #{_lambda_.2} parent=19 // pred_check
            _
          $region22: #{_lambda_.2} parent=19 // pred_check_branch
            %106 = sbr.rel (0) target = $region24
          $region23: #{_lambda_.2} parent=19 // pred_region
            // Predicated region
            $region25: #{_lambda_.2} parent=23 // pred_check
              _
            $region26: #{_lambda_.2} parent=23 // pred_check_branch
              %108 = sbr.rel target = $region28
            $region27: #{_lambda_.2} parent=23 // pred_region
              // Predicated region
              $region40: #{_lambda_.2} parent=27 // pred_check
                _
              $region41: #{_lambda_.2} parent=27 // pred_check_branch
                %129 = sbr.rel (0) target = $region43
              $region42: #{_lambda_.2} parent=27 // pred_region
                loop: start=0, step=1, limit=1
                $region44: #{_lambda_.2} parent=42 // loop_pre_header
                  _
                $region45: #{_lambda_.2} parent=42 // loop_header
                  %s131 = sphi 0, %s135
                  %p132 = scmp.ge.s32.totalorder %s131, 1
                  %s136 = sphi %s104, %s104
                  %s137 = sphi %s100, %s100
                $region46: #{_lambda_.2} parent=42 // loop_header_branch
                  %134 = sbr.rel (%p132) target = $region50
                $region47: #{_lambda_.2} parent=42 // loop_body
                  _
                $region48: #{_lambda_.2} parent=42 // loop_footer
                  %s135 = sadd.s32 1, %s131
                $region49: #{_lambda_.2} parent=42 // loop_footer_branch
                  %130 = sbr.rel target = $region45
                $region50: #{_lambda_.2} parent=42 // loop_exit
                  _
                loop: start=0, step=1, limit=1
                $region51: #{_lambda_.2} parent=42 // loop_pre_header
                  _
                $region52: #{_lambda_.2} parent=42 // loop_header
                  %s140 = sphi 0, %s144
                  %p141 = scmp.ge.s32.totalorder %s140, 1
                  %s145 = sphi %s104, %s104
                  %s146 = sphi %s100, %s100
                $region53: #{_lambda_.2} parent=42 // loop_header_branch
                  %143 = sbr.rel (%p141) target = $region57
                $region54: #{_lambda_.2} parent=42 // loop_body
                  %v147 = vld [vmem:[%s145] sm:$0x3]
                  %148 = vst [vmem:[%s146] sm:$0x3] %v147
                  %v149 = vld [vmem:[%s145 + $0x4] sm:$0x3]
                  %150 = vst [vmem:[%s146 + $0x2] sm:$0x3] %v149
                  %v151 = vld [vmem:[%s145 + $0x8] sm:$0x3]
                  %152 = vst [vmem:[%s146 + $0x4] sm:$0x3] %v151
                  %v153 = vld [vmem:[%s145 + $0xc] sm:$0x3]
                  %154 = vst [vmem:[%s146 + $0x6] sm:$0x3] %v153
                $region55: #{_lambda_.2} parent=42 // loop_footer
                  %s144 = sadd.s32 1, %s140
                $region56: #{_lambda_.2} parent=42 // loop_footer_branch
                  %139 = sbr.rel target = $region52
                $region57: #{_lambda_.2} parent=42 // loop_exit
                  _
              $region43: #{_lambda_.2} parent=27 // pred_fallthru
                _
            $region28: #{_lambda_.2} parent=23 // pred_fallthru
              _
            // Predicated region
            $region29: #{_lambda_.2} parent=23 // pred_check
              _
            $region30: #{_lambda_.2} parent=23 // pred_check_branch
              %110 = sbr.rel (0) target = $region32
            $region31: #{_lambda_.2} parent=23 // pred_region
              loop: start=0, step=1, limit=1
              $region33: #{_lambda_.2} parent=31 // loop_pre_header
                _
              $region34: #{_lambda_.2} parent=31 // loop_header
                %s113 = sphi 0, %s117
                %p114 = scmp.ge.s32.totalorder %s113, 1
                %s118 = sphi %s104, %s104
                %s119 = sphi %s100, %s100
              $region35: #{_lambda_.2} parent=31 // loop_header_branch
                %116 = sbr.rel (%p114) target = $region39
              $region36: #{_lambda_.2} parent=31 // loop_body
                %v120 = vld [vmem:[%s118] sm:$0x3]
                %121 = vst [vmem:[%s119] sm:$0x3] %v120
                %v122 = vld [vmem:[%s118 + $0x4] sm:$0x3]
                %123 = vst [vmem:[%s119 + $0x2] sm:$0x3] %v122
                %v124 = vld [vmem:[%s118 + $0x8] sm:$0x3]
                %125 = vst [vmem:[%s119 + $0x4] sm:$0x3] %v124
                %v126 = vld [vmem:[%s118 + $0xc] sm:$0x3]
                %127 = vst [vmem:[%s119 + $0x6] sm:$0x3] %v126
              $region37: #{_lambda_.2} parent=31 // loop_footer
                %s117 = sadd.s32 1, %s113
              $region38: #{_lambda_.2} parent=31 // loop_footer_branch
                %112 = sbr.rel target = $region34
              $region39: #{_lambda_.2} parent=31 // loop_exit
                _
            $region32: #{_lambda_.2} parent=23 // pred_fallthru
              _
          $region24: #{_lambda_.2} parent=19 // pred_fallthru
            _
          %155 = vnop
        $region20: #{_lambda_.2} parent=15 // pred_fallthru
          _
      $region16: #{_lambda_.2} parent=5 // pred_fallthru
        _
      %p156 = scmp.le.s32.totalorder 1, %s7
      %p157 = scmp.lt.s32.totalorder %s7, 3
      %p158 = pnand %p156, %p157
      %p159 = pneg %p158
      // Predicated region
      $region58: #{_lambda_.2} parent=5 // pred_check
        _
      $region59: #{_lambda_.2} parent=5 // pred_check_branch
        %161 = sbr.rel (%p158) target = $region61
      $region60: #{_lambda_.2} parent=5 // pred_region
        %s162 = ssub.s32 %s7, 1
        %s163 = sand.u32 %s34, 1
        %s164 = sand.u32 %s34, 1
        %s165 = smul.addr %s164, 8
        %s166 = scalar_lea.vmem [#allocation2], %s165
        // Predicated region
        $region62: #{_lambda_.2} parent=60 // pred_check
          %p167 = pneg %p47
        $region63: #{_lambda_.2} parent=60 // pred_check_branch
          %169 = sbr.rel (%p167) target = $region65
        $region64: #{_lambda_.2} parent=60 // pred_region
          _
        $region65: #{_lambda_.2} parent=60 // pred_fallthru
          _
        %s170 = sand.u32 %s34, 1
        %s171 = sand.u32 %s34, 1
        %s172 = smul.addr %s171, 8
        %s173 = scalar_lea.vmem [#allocation2], %s172
        %p174 = pneg %p47
        %p175 = pneg %p44
        %p176 = pneg %p75
        %p177 = pneg %p72
        %p178 = scmp.lt.s32.totalorder %s16, 1
        %s179 = scalar_select %p178, %s16, 1
        %p180 = scmp.lt.s32.totalorder %s17, 0
        %s181 = scalar_select %p180, %s17, 0
        %s182 = smul.addr %s181, 2
        %s183 = smul.addr %s179, 8
        %s184 = sadd.s32 %s182, %s183
        %s185 = scalar_lea.vmem %s1, %s184
        %p186 = scmp.lt.s32.totalorder %s16, 1
        %s187 = scalar_select %p186, %s16, 1
        %p188 = scmp.lt.s32.totalorder %s17, 0
        %s189 = scalar_select %p188, %s17, 0
        %s190 = smul.addr %s189, 2
        %s191 = smul.addr %s187, 8
        %s192 = sadd.s32 %s190, %s191
        %s193 = scalar_lea.vmem %s1, %s192
        %v194 = vld [vmem:[%s166] sm:$0x3]
        %s195 = scalar_lea.vmem %s166, 4 [#allocation2]
        %v196 = vld [vmem:[%s195] sm:$0x3]
        %s197 = scalar_lea.vmem %s166, 2 [#allocation2]
        %v198 = vld [vmem:[%s197] sm:$0x3]
        %s199 = scalar_lea.vmem %s166, 6 [#allocation2]
        %v200 = vld [vmem:[%s199] sm:$0x3]
        %v201 = vadd.f32 %v194, %v196
        %v202 = vadd.f32 %v198, %v200
        %v203 = vsub.f32 %v196, %v194
        %v204 = vsub.f32 %v200, %v198
        %v205 = vadd.f32 %v201, %v202
        %v206 = vmul.f32 %v205, 0.5
        %v207 = vlaneseq
        %vm208 = vcmp.ge.s32.totalorder %v207, 0
        %vm209 = vcmp.lt.s32.totalorder %v207, 256
        %vm210 = vmand %vm208, %vm209
        %211 = vst.msk [vmem:[%s193] sm:$0x3] %vm210, %v206
        %v212 = vsub.f32 %v202, %v201
        %v213 = vmul.f32 %v212, 0.5
        %s214 = scalar_lea.vmem %s193, 2
        %215 = vst.msk [vmem:[%s214] sm:$0x3] %vm210, %v213
        %v216 = vadd.f32 %v203, %v204
        %v217 = vmul.f32 %v216, 0.5
        %s218 = scalar_lea.vmem %s193, 4
        %219 = vst.msk [vmem:[%s218] sm:$0x3] %vm210, %v217
        %v220 = vsub.f32 %v204, %v203
        %v221 = vmul.f32 %v220, 0.5
        %s222 = scalar_lea.vmem %s193, 6
        %223 = vst.msk [vmem:[%s222] sm:$0x3] %vm210, %v221
        %p224 = scmp.lt.s32.totalorder %s16, 1
        %s225 = scalar_select %p224, %s16, 1
        %p226 = scmp.lt.s32.totalorder %s17, 0
        %s227 = scalar_select %p226, %s17, 0
        %s228 = smul.addr %s227, 2
        %s229 = smul.addr %s225, 8
        %s230 = sadd.s32 %s228, %s229
        %s231 = scalar_lea.vmem %s1, %s230
        // Predicated region
        $region66: #{_lambda_.2} parent=60 // pred_check
          %p232 = pneg %p72
        $region67: #{_lambda_.2} parent=60 // pred_check_branch
          %234 = sbr.rel (%p232) target = $region69
        $region68: #{_lambda_.2} parent=60 // pred_region
          _
        $region69: #{_lambda_.2} parent=60 // pred_fallthru
          _
      $region61: #{_lambda_.2} parent=5 // pred_fallthru
        _
      %p235 = scmp.le.s32.totalorder 2, %s7
      // Predicated region
      $region70: #{_lambda_.2} parent=5 // pred_check
        %p236 = pneg %p235
      $region71: #{_lambda_.2} parent=5 // pred_check_branch
        %238 = sbr.rel (%p236) target = $region73
      $region72: #{_lambda_.2} parent=5 // pred_region
        %s239 = ssub.s32 %s7, 2
        // Predicated region
        $region74: #{_lambda_.2} parent=72 // pred_check
          %p240 = pneg %p78
        $region75: #{_lambda_.2} parent=72 // pred_check_branch
          %242 = sbr.rel (%p240) target = $region77
        $region76: #{_lambda_.2} parent=72 // pred_region
          %p243 = scmp.lt.s32.totalorder %s18, 1
          %s244 = scalar_select %p243, %s18, 1
          %p245 = scmp.lt.s32.totalorder %s19, 0
          %s246 = scalar_select %p245, %s19, 0
          %s247 = smul.addr %s246, 2
          %s248 = smul.addr %s244, 8
          %s249 = sadd.s32 %s247, %s248
          %s250 = scalar_lea.vmem %s1, %s249
        $region77: #{_lambda_.2} parent=72 // pred_fallthru
          _
      $region73: #{_lambda_.2} parent=5 // pred_fallthru
        _
    $region6: #{_lambda_.2} parent=1 // loop_footer
      %s11 = sadd.s32 1, %s7
    $region7: #{_lambda_.2} parent=1 // loop_footer_branch
      %6 = sbr.rel target = $region3
    $region8: #{_lambda_.2} parent=1 // loop_exit
      _

// kernel: _lambda_.3
$region0: #{_lambda_.3}
  #allocation0 [shape = 'u32[]', space=smem, size = 0x4, offset = 0x4, fixed_abs, tag = 'smem constant byte address 0x4 - core index']
  #allocation1 [shape = 'u32[144,128]{1,0:T(1,128)}', space=vmem, size = 0x12000, scoped, tag = 'internal scratch']
  %s0 = inlined_call_operand.vmem [shape: f32[8,256], index: 0, kind: input, shape index: {}]
  %s1 = inlined_call_operand.vmem [shape: f32[8,1], index: 1, kind: input, shape index: {}]
  %s2 = inlined_call_operand.vmem [shape: f32[8,256], index: 2, kind: output, shape index: {}]
  %s3 = sld [smem:[#allocation0]]
  $region18: #{_lambda_.3} parent=0
    _
  %s5 = ssub.s32 1, %s3
  %s6 = scalar_select 0, %s5, %s3
  // Predicated region
  $region2: #{_lambda_.3} parent=0 // pred_check
    _
  $region3: #{_lambda_.3} parent=0 // pred_check_branch
    %8 = sbr.rel (0) target = $region5
  $region4: #{_lambda_.3} parent=0 // pred_region
    _
  $region5: #{_lambda_.3} parent=0 // pred_fallthru
    _
  // Predicated region
  $region6: #{_lambda_.3} parent=0 // pred_check
    _
  $region7: #{_lambda_.3} parent=0 // pred_check_branch
    %10 = sbr.rel (0) target = $region9
  $region8: #{_lambda_.3} parent=0 // pred_region
    _
  $region9: #{_lambda_.3} parent=0 // pred_fallthru
    _
  %v11 = vld [vmem:[%s0] sm:$0xff]
  %v12 = vld [vmem:[%s0 + $0x8] sm:$0xff]
  %v13 = vld [vmem:[%s1] sm:$0xff]
  %15 = vset.pattern.permute.xlu0 0
  %16 = vperm.xlu0 %15, %v13
  %v17 = vpop.permute.xlu0 %16
  %v19 = vmul.f32 %v11, %v17
  %v20 = vmul.f32 %v12, %v17
  %21 = vst [vmem:[%s2] sm:$0xff] %v19
  %22 = vst [vmem:[%s2 + $0x8] sm:$0xff] %v20
  // Predicated region
  $region10: #{_lambda_.3} parent=0 // pred_check
    _
  $region11: #{_lambda_.3} parent=0 // pred_check_branch
    %24 = sbr.rel (0) target = $region13
  $region12: #{_lambda_.3} parent=0 // pred_region
    _
  $region13: #{_lambda_.3} parent=0 // pred_fallthru
    _
  // Predicated region
  $region14: #{_lambda_.3} parent=0 // pred_check
    _
  $region15: #{_lambda_.3} parent=0 // pred_check_branch
    %26 = sbr.rel (0) target = $region17
  $region16: #{_lambda_.3} parent=0 // pred_region
    _
  $region17: #{_lambda_.3} parent=0 // pred_fallthru
    _

</llo_original>
